<compile_context>
chip_gen: v7x
topology: tpu7x:2x2x1
jax: 0.10.0
libtpu: 0.0.40
codegen_flags: <defaults>
</compile_context>

<pallas_src>
import functools

import jax
import jax.numpy as jnp
from jax.experimental import pallas as pl
from jax.experimental.pallas import tpu as pltpu


def _snake_kernel(x_ref, o_ref, *, omega):
    # y = x + sin(omega*x)^2 / omega
    #   = x + (0.5/omega) * (1 - cos(2*omega*x))      (exact half-angle identity)
    xf = x_ref[...].astype(jnp.float32)
    c = jnp.cos((2.0 * omega) * xf)
    o_ref[...] = (xf + (0.5 / omega) * (1.0 - c)).astype(o_ref.dtype)


_TARGET_BLOCK_BYTES = 6 * 1024 * 1024   # ~6 MiB/block -> 4x (dbl-buffered in+out) = 24 MiB


def _pick_width(total: int, cap: int = 1024) -> int:
    """Largest multiple-of-128 divisor of `total` that is <= cap (0 if none)."""
    best = 0
    w = 128
    while w <= min(total, cap):
        if total % w == 0:
            best = w
        w += 128
    return best


def snake(x, omega: float = 1.0):
    """Snake activation: x + (1/omega) * sin(omega * x)**2 (elementwise)."""
    omega = float(omega)
    orig_shape = x.shape
    dtype = x.dtype
    total = x.size
    if total == 0:
        return x

    itemsize = jnp.dtype(dtype).itemsize
    # Sublane row quantum for this dtype: f32 -> 8, bf16 -> 16, int8/fp8 -> 32.
    quantum = max(8, 32 // itemsize)

    flat = x.reshape(-1)                 # free: x is contiguous

    W = _pick_width(total)
    if W:
        # Common case: free reshape into a lane-dense (rows, W) slab (no pad).
        rows = total // W
        x2d = flat.reshape(rows, W)

        # Row-block sizing:
        #  * ~6 MiB of data per block (dtype-scaled) to amortize the ~0.35us
        #    per-grid-step overhead with large DMA transfers,
        #  * but at least ~4 grid steps (>=2 on mid-size inputs) so the
        #    pipeline overlaps DMA/compute and v7x can use both TensorCores.
        rows_budget = max(
            quantum, ((_TARGET_BLOCK_BYTES // (W * itemsize)) // quantum) * quantum)
        if rows >= 4 * quantum:
            rows_split = quantum * pl.cdiv(rows, 4 * quantum)
            block_rows = min(rows_budget, rows_split)
        elif rows >= 2 * quantum:
            block_rows = quantum * pl.cdiv(rows, 2 * quantum)
        else:
            block_rows = rows            # full row extent (always layout-legal)
        block_rows = min(block_rows, rows)
        block_shape = (block_rows, W)
        grid = (pl.cdiv(rows, block_rows),)
        index_map = lambda i: (i, 0)
    else:
        # Rare ragged case (total not a multiple of 128): keep a (1, total)
        # strip and tile along lanes.  The partial trailing block is handled
        # by Pallas' masked pipeline (safe: idempotent elementwise op).
        # Still zero extra HBM traffic: no pad, no trailing slice.
        x2d = flat.reshape(1, total)
        cols_budget = 64 * 1024          # multiple of 128
        block_cols = total if total <= cols_budget else cols_budget
        block_shape = (1, block_cols)
        grid = (pl.cdiv(total, block_cols),)
        index_map = lambda i: (0, i)

    cost = pl.CostEstimate(
        flops=4 * total,
        transcendentals=total,
        bytes_accessed=2 * total * itemsize,
    )

    out2d = pl.pallas_call(
        functools.partial(_snake_kernel, omega=omega),
        out_shape=jax.ShapeDtypeStruct(x2d.shape, dtype),
        grid_spec=pltpu.PrefetchScalarGridSpec(
            num_scalar_prefetch=0,
            grid=grid,
            in_specs=[pl.BlockSpec(block_shape, index_map)],
            out_specs=pl.BlockSpec(block_shape, index_map),
        ),
        compiler_params=pltpu.CompilerParams(
            dimension_semantics=("parallel",),
            # 4 x ~6 MiB live blocks fit comfortably; explicit limit so v5e's
            # 16 MiB scoped default doesn't shrink the blocks, and we stay
            # under v7x's 64 MiB physical / 32 MiB scoped VMEM.
            vmem_limit_bytes=32 * 1024 * 1024,
        ),
        cost_estimate=cost,
    )(x2d)

    return out2d.reshape(orig_shape)     # free: shapes have identical totals


def snake_ref(x, omega: float = 1.0):
    return x + (1.0 / omega) * jnp.sin(omega * x) ** 2


if __name__ == "__main__":
    key = jax.random.PRNGKey(0)
    k1, k2, k3, k4, k5 = jax.random.split(key, 5)

    # NCHW activation map, like the PyTorch module would see.
    x = jax.random.normal(k1, (2, 4, 16, 16), dtype=jnp.float32)
    y = snake(x, 1.0)
    jax.block_until_ready(y)
    assert y.shape == x.shape and y.dtype == x.dtype
    assert jnp.allclose(y, snake_ref(x, 1.0), atol=1e-5, rtol=1e-5)

    # Non-unit omega; total = 1536 picks a W=768 slab with no padding.
    x2 = jax.random.normal(k2, (2, 3, 16, 16), dtype=jnp.float32)
    y2 = snake(x2, 0.5)
    jax.block_until_ready(y2)
    assert jnp.allclose(y2, snake_ref(x2, 0.5), atol=1e-5, rtol=1e-5)

    # Multi-grid-step path (rows split into >= 2 blocks -> pipelined / dual-TC).
    x3 = jax.random.normal(k3, (4, 8, 32, 32), dtype=jnp.float32)
    y3 = snake(x3, 2.0)
    jax.block_until_ready(y3)
    assert jnp.allclose(y3, snake_ref(x3, 2.0), atol=1e-5, rtol=1e-5)

    # Ragged fallback: 3*5*7 = 105 elements (not a multiple of 128) -> no pad/slice.
    x4 = jax.random.normal(k4, (3, 5, 7), dtype=jnp.float32)
    y4 = snake(x4, 1.0)
    jax.block_until_ready(y4)
    assert y4.shape == x4.shape and y4.dtype == x4.dtype
    assert jnp.allclose(y4, snake_ref(x4, 1.0), atol=1e-5, rtol=1e-5)

    # bf16 input: dtype-scaled row blocks; compute stays in f32 inside the kernel.
    x5 = jax.random.normal(k5, (4, 8, 32, 32), dtype=jnp.bfloat16)
    y5 = snake(x5, 1.0)
    jax.block_until_ready(y5)
    assert y5.dtype == jnp.bfloat16
    ref5 = snake_ref(x5.astype(jnp.float32), 1.0)
    assert jnp.allclose(y5.astype(jnp.float32), ref5, atol=1e-1, rtol=5e-2)

    print("KERNEL_OK")
</pallas_src>

<mosaic_0001>
module attributes {stable_mosaic.version = 11 : i64} {
  func.func @_snake_kernel(%arg0: i32, %arg1: memref<2x1024xf32, #tpu.memory_space<vmem>>, %arg2: memref<2x1024xf32, #tpu.memory_space<vmem>>) attributes {dimension_semantics = [#tpu.dimension_semantics<parallel>], iteration_bounds = array<i64: 1>, scalar_prefetch = 0 : i64, scratch_operands = 0 : i64, tpu.core_type = #tpu.core_type<tc>, window_params = [{transform_indices = @transform_0, window_bounds = array<i64: 2, 1024>}, {transform_indices = @transform_1, window_bounds = array<i64: 2, 1024>}]} {
    %c0 = arith.constant 0 : index
    %c0_0 = arith.constant 0 : index
    %0 = vector.load %arg1[%c0, %c0_0] : memref<2x1024xf32, #tpu.memory_space<vmem>>, vector<2x1024xf32>
    %cst = arith.constant 2.000000e+00 : f32
    %1 = vector.broadcast %cst : f32 to vector<2x1024xf32>
    %2 = arith.mulf %1, %0 : vector<2x1024xf32>
    %3 = math.cos %2 : vector<2x1024xf32>
    %cst_1 = arith.constant 1.000000e+00 : f32
    %4 = vector.broadcast %cst_1 : f32 to vector<2x1024xf32>
    %5 = arith.subf %4, %3 : vector<2x1024xf32>
    %cst_2 = arith.constant 5.000000e-01 : f32
    %6 = vector.broadcast %cst_2 : f32 to vector<2x1024xf32>
    %7 = arith.mulf %6, %5 : vector<2x1024xf32>
    %8 = arith.addf %0, %7 : vector<2x1024xf32>
    %c0_3 = arith.constant 0 : index
    %c0_4 = arith.constant 0 : index
    %9 = vector.load %arg2[%c0_3, %c0_4] : memref<2x1024xf32, #tpu.memory_space<vmem>>, vector<2x1024xf32>
    tpu.vector_store %arg2[%c0_3, %c0_4], %8 {strides = array<i32>} : memref<2x1024xf32, #tpu.memory_space<vmem>>, vector<2x1024xf32>,
    return
  }
  func.func @transform_0(%arg0: i32) -> (i32, i32) {
    %c0_i32 = arith.constant 0 : i32
    %c0_i32_0 = arith.constant 0 : i32
    return %arg0, %c0_i32 : i32, i32
  }
  func.func @transform_1(%arg0: i32) -> (i32, i32) {
    %c0_i32 = arith.constant 0 : i32
    %c0_i32_0 = arith.constant 0 : i32
    return %arg0, %c0_i32 : i32, i32
  }
}

</mosaic_0001>

<llo_original>
// kernel: tpu_custom_call.1
$region0: #{tpu_custom_call.1}
  #allocation0 [shape = 'u32[]', space=smem, size = 0x4, offset = 0x4, fixed_abs, tag = 'smem constant byte address 0x4 - core index']
  #allocation1 [shape = 'u32[144,128]{1,0:T(1,128)}', space=vmem, size = 0x12000, scoped, tag = 'internal scratch']
  %s0 = inlined_call_operand.hbm [shape: f32[2,1024], index: 0, kind: input, shape index: {}]
  %s1 = inlined_call_operand.hbm [shape: f32[2,1024], index: 1, kind: output, shape index: {}]
  %s2 = sld [smem:[#allocation0]]
  $region18: #{tpu_custom_call.1} parent=0
    _
  %s4 = ssub.s32 1, %s2
  %s5 = scalar_select 0, %s4, %s2
  $region1: #{tpu_custom_call.1} parent=0
    #allocation2 [shape = 'u8[8192]{0}', space=vmem, size = 0x2000, scoped, tag = 'input window, operand 0, single buffered']
    #allocation3 [shape = 's32[1]{0}', space=sflag, size = 0x4, scoped, tag = 'scoped memory for tpu_custom_call.1']
    #allocation4 [shape = 's32[1]{0}', space=sflag, size = 0x4, scoped, tag = 'scoped memory for tpu_custom_call.1']
    #allocation5 [shape = 'u8[8192]{0}', space=vmem, size = 0x2000, scoped, tag = 'output window, operand 0, single buffered']
    %6 = vsyncpa [#allocation3], 0
    %7 = vsyncpa [#allocation4], 0
    // Predicated region
    $region2: #{tpu_custom_call.1} parent=1 // pred_check
      _
    $region3: #{tpu_custom_call.1} parent=1 // pred_check_branch
      %9 = sbr.rel (0) target = $region5
    $region4: #{tpu_custom_call.1} parent=1 // pred_region
      %s11 = ssub.s32 256, 256
      %12 = vsyncadd [#allocation3], %s11
      %s14 = sshll.u32 [#allocation2], 4
      %s15 = int_to_ptr.vmem [resolvable:$true] %s14
      %17 = dma.hbm_to_vmem [thread:$0]  %s0, 256, %s15, [#allocation3]
    $region5: #{tpu_custom_call.1} parent=1 // pred_fallthru
      _
    // Predicated region
    $region6: #{tpu_custom_call.1} parent=1 // pred_check
      _
    $region7: #{tpu_custom_call.1} parent=1 // pred_check_branch
      %19 = sbr.rel (0) target = $region9
    $region8: #{tpu_custom_call.1} parent=1 // pred_region
      %20 = dma.done [#allocation3], 256
    $region9: #{tpu_custom_call.1} parent=1 // pred_fallthru
      _
    %v21 = vld [vmem:[#allocation2] sm:$0xff]
    %v22 = vld [vmem:[#allocation2 + $0x8] sm:$0xff]
    %v23 = vmul.f32 %v21, 2.0
    %v24 = vmul.f32 %v22, 2.0
    %v25 = vand.u32 2147483647, %v23
    %vm26 = vcmp.le.f32.partialorder %v25, 0.7853982
    %vm27 = vcmp.lt.s32.totalorder %v23, 0
    %v28 = vand.u32 %v23, 2139095040
    %v29 = vshrl.u32 %v28, 23
    %v30 = vsub.s32 %v29, 127
    %v31 = vand.u32 2147483647, %v23
    %v32 = vand.u32 %v31, 8388607
    %v33 = vor.u32 %v32, 8388608
    %v34 = vsub.s32 0, %v33
    %v35 = vadd.s32 %v30, 1
    %vm36 = vcmp.gt.s32.totalorder %v35, 0
    %v37 = vsel %vm36, %v35, 0
    %v38 = vshrl.u32 %v37, 5
    %v39 = vand.u32 %v37, 31
    %v40 = vsub.s32 32, %v39
    %v41 = vshrl.u32 683565275, %v40
    %v42 = vshll.u32 683565275, %v39
    %v43 = vshrl.u32 2475754826, %v40
    %v44 = vor.u32 %v42, %v43
    %v45 = vshll.u32 2475754826, %v39
    %v46 = vshrl.u32 2131351028, %v40
    %v47 = vor.u32 %v45, %v46
    %v48 = vshll.u32 2131351028, %v39
    %v49 = vshrl.u32 2102212464, %v40
    %v50 = vor.u32 %v48, %v49
    %v51 = vshll.u32 2102212464, %v39
    %v52 = vshrl.u32 920167782, %v40
    %v53 = vor.u32 %v51, %v52
    %v54 = vshll.u32 920167782, %v39
    %v55 = vshrl.u32 1326507024, %v40
    %v56 = vor.u32 %v54, %v55
    %vm57 = vcmp.lt.s32.totalorder %v38, 1
    %vm58 = vcmp.lt.s32.totalorder %v38, 2
    %vm59 = vcmp.lt.s32.totalorder %v38, 3
    %vm60 = vcmp.lt.s32.totalorder %v38, 4
    %v61 = vsel %vm57, %v41, %v44
    %v62 = vsel %vm60, %v50, 2102212464
    %v63 = vsel %vm59, %v47, %v62
    %v64 = vsel %vm58, %v61, %v63
    %v65 = vsel %vm57, %v44, %v47
    %v66 = vsel %vm60, %v53, 920167782
    %v67 = vsel %vm59, %v50, %v66
    %v68 = vsel %vm58, %v65, %v67
    %v69 = vsel %vm57, %v47, %v50
    %v70 = vsel %vm60, %v56, 1326507024
    %v71 = vsel %vm59, %v53, %v70
    %v72 = vsel %vm58, %v69, %v71
    %v73 = vshll.u32 %v33, 8
    %v74 = vmul.u32.u64.compose %v73, %v72
    %v75 = vextract.low.u32 %v74
    %v76 = vextract.high.u32 %v74
    %v77 = vmul.u32.u64.compose %v73, %v68
    %v78 = vextract.low.u32 %v77
    %v79 = vextract.high.u32 %v77
    %v80 = vmul.u32 %v73, %v64
    %v81 = vadd.s32 %v76, %v78
    %vm82 = vc.u32 %v76, %v78
    %v83 = vadd.s32 %v79, 1
    %v84 = vsel %vm82, %v83, %v79
    %v85 = vadd.s32 %v80, %v84
    %v86 = vadd.s32 %v85, 536870912
    %v87 = vshrl.u32 %v86, 30
    %v88 = vshll.u32 %v87, 30
    %v89 = vsub.s32 %v85, %v88
    %vm90 = vcmp.lt.s32.totalorder %v89, 0
    %v91 = vsub.s32 0, %v89
    %v92 = vsel %vm90, %v91, %v89
    %v93 = vclz %v92
    %v94 = vsub.s32 %v93, 2
    %vm95 = vcmp.gt.s32.totalorder 0, %v94
    %v96 = vsel %vm95, 0, %v94
    %v97 = vsub.s32 32, %v96
    %v98 = vshll.u32 %v89, %v96
    %v99 = vshrl.u32 %v81, %v97
    %v100 = vor.u32 %v98, %v99
    %v101 = vsub.s32 4294967266, %v96
    %v102 = vadd.s32 %v101, 127
    %v103 = vshll.u32 %v102, 23
    %v104 = vor.u32 4788187, %v103
    %v105 = vand.u32 2147483647, %v104
    %v107 = vcvt.s32.f32 %v100
    %v108 = vmul.f32 %v107, %v105
    %v109 = vxor.u32 %v108, 2147483648
    %v110 = vsel %vm27, %v109, %v108
    %v111 = vsub.s32 4, %v87
    %v112 = vsel %vm27, %v111, %v87
    %v113 = vsel %vm26, %v23, %v110
    %v114 = vsel %vm26, 0, %v112
    %v115 = vcosq.f32.pop %v113
    %v116 = vsinq.f32.pop %v113
    %vm117 = vweird.f32 %v23
    %v118 = vand.u32 %v114, 3
    %vm119 = vcmp.lt.s32.totalorder %v118, 2
    %vm120 = vcmp.eq.s32.totalorder %v118, 0
    %v121 = vxor.u32 %v116, 2147483648
    %v122 = vsel %vm120, %v115, %v121
    %vm123 = vcmp.eq.s32.totalorder %v118, 2
    %v124 = vxor.u32 %v115, 2147483648
    %v125 = vsel %vm123, %v124, %v116
    %v126 = vsel %vm119, %v122, %v125
    %v127 = vsel %vm117, nan, %v126
    %v128 = vand.u32 2147483647, %v24
    %vm129 = vcmp.le.f32.partialorder %v128, 0.7853982
    %vm130 = vcmp.lt.s32.totalorder %v24, 0
    %v131 = vand.u32 %v24, 2139095040
    %v132 = vshrl.u32 %v131, 23
    %v133 = vsub.s32 %v132, 127
    %v134 = vand.u32 2147483647, %v24
    %v135 = vand.u32 %v134, 8388607
    %v136 = vor.u32 %v135, 8388608
    %v137 = vsub.s32 0, %v136
    %v138 = vadd.s32 %v133, 1
    %vm139 = vcmp.gt.s32.totalorder %v138, 0
    %v140 = vsel %vm139, %v138, 0
    %v141 = vshrl.u32 %v140, 5
    %v142 = vand.u32 %v140, 31
    %v143 = vsub.s32 32, %v142
    %v144 = vshrl.u32 683565275, %v143
    %v145 = vshll.u32 683565275, %v142
    %v146 = vshrl.u32 2475754826, %v143
    %v147 = vor.u32 %v145, %v146
    %v148 = vshll.u32 2475754826, %v142
    %v149 = vshrl.u32 2131351028, %v143
    %v150 = vor.u32 %v148, %v149
    %v151 = vshll.u32 2131351028, %v142
    %v152 = vshrl.u32 2102212464, %v143
    %v153 = vor.u32 %v151, %v152
    %v154 = vshll.u32 2102212464, %v142
    %v155 = vshrl.u32 920167782, %v143
    %v156 = vor.u32 %v154, %v155
    %v157 = vshll.u32 920167782, %v142
    %v158 = vshrl.u32 1326507024, %v143
    %v159 = vor.u32 %v157, %v158
    %vm160 = vcmp.lt.s32.totalorder %v141, 1
    %vm161 = vcmp.lt.s32.totalorder %v141, 2
    %vm162 = vcmp.lt.s32.totalorder %v141, 3
    %vm163 = vcmp.lt.s32.totalorder %v141, 4
    %v164 = vsel %vm160, %v144, %v147
    %v165 = vsel %vm163, %v153, 2102212464
    %v166 = vsel %vm162, %v150, %v165
    %v167 = vsel %vm161, %v164, %v166
    %v168 = vsel %vm160, %v147, %v150
    %v169 = vsel %vm163, %v156, 920167782
    %v170 = vsel %vm162, %v153, %v169
    %v171 = vsel %vm161, %v168, %v170
    %v172 = vsel %vm160, %v150, %v153
    %v173 = vsel %vm163, %v159, 1326507024
    %v174 = vsel %vm162, %v156, %v173
    %v175 = vsel %vm161, %v172, %v174
    %v176 = vshll.u32 %v136, 8
    %v177 = vmul.u32.u64.compose %v176, %v175
    %v178 = vextract.low.u32 %v177
    %v179 = vextract.high.u32 %v177
    %v180 = vmul.u32.u64.compose %v176, %v171
    %v181 = vextract.low.u32 %v180
    %v182 = vextract.high.u32 %v180
    %v183 = vmul.u32 %v176, %v167
    %v184 = vadd.s32 %v179, %v181
    %vm185 = vc.u32 %v179, %v181
    %v186 = vadd.s32 %v182, 1
    %v187 = vsel %vm185, %v186, %v182
    %v188 = vadd.s32 %v183, %v187
    %v189 = vadd.s32 %v188, 536870912
    %v190 = vshrl.u32 %v189, 30
    %v191 = vshll.u32 %v190, 30
    %v192 = vsub.s32 %v188, %v191
    %vm193 = vcmp.lt.s32.totalorder %v192, 0
    %v194 = vsub.s32 0, %v192
    %v195 = vsel %vm193, %v194, %v192
    %v196 = vclz %v195
    %v197 = vsub.s32 %v196, 2
    %vm198 = vcmp.gt.s32.totalorder 0, %v197
    %v199 = vsel %vm198, 0, %v197
    %v200 = vsub.s32 32, %v199
    %v201 = vshll.u32 %v192, %v199
    %v202 = vshrl.u32 %v184, %v200
    %v203 = vor.u32 %v201, %v202
    %v204 = vsub.s32 4294967266, %v199
    %v205 = vadd.s32 %v204, 127
    %v206 = vshll.u32 %v205, 23
    %v207 = vor.u32 4788187, %v206
    %v208 = vand.u32 2147483647, %v207
    %v210 = vcvt.s32.f32 %v203
    %v211 = vmul.f32 %v210, %v208
    %v212 = vxor.u32 %v211, 2147483648
    %v213 = vsel %vm130, %v212, %v211
    %v214 = vsub.s32 4, %v190
    %v215 = vsel %vm130, %v214, %v190
    %v216 = vsel %vm129, %v24, %v213
    %v217 = vsel %vm129, 0, %v215
    %v218 = vcosq.f32.pop %v216
    %v219 = vsinq.f32.pop %v216
    %vm220 = vweird.f32 %v24
    %v221 = vand.u32 %v217, 3
    %vm222 = vcmp.lt.s32.totalorder %v221, 2
    %vm223 = vcmp.eq.s32.totalorder %v221, 0
    %v224 = vxor.u32 %v219, 2147483648
    %v225 = vsel %vm223, %v218, %v224
    %vm226 = vcmp.eq.s32.totalorder %v221, 2
    %v227 = vxor.u32 %v218, 2147483648
    %v228 = vsel %vm226, %v227, %v219
    %v229 = vsel %vm222, %v225, %v228
    %v230 = vsel %vm220, nan, %v229
    %v231 = vsub.f32 1.0, %v127
    %v232 = vsub.f32 1.0, %v230
    %v233 = vmul.f32 %v231, 0.5
    %v234 = vmul.f32 %v232, 0.5
    %v235 = vadd.f32 %v21, %v233
    %v236 = vadd.f32 %v22, %v234
    %237 = vst [vmem:[#allocation5] sm:$0xff] %v235
    %238 = vst [vmem:[#allocation5 + $0x8] sm:$0xff] %v236
    // Predicated region
    $region10: #{tpu_custom_call.1} parent=1 // pred_check
      _
    $region11: #{tpu_custom_call.1} parent=1 // pred_check_branch
      %240 = sbr.rel (0) target = $region13
    $region12: #{tpu_custom_call.1} parent=1 // pred_region
      %s242 = ssub.s32 256, 256
      %243 = vsyncadd [#allocation4], %s242
      %s245 = sshll.u32 [#allocation5], 4
      %s246 = int_to_ptr.vmem [resolvable:$true] %s245
      %248 = dma.vmem_to_hbm [thread:$0]  %s246, 256, %s1, [#allocation4]
    $region13: #{tpu_custom_call.1} parent=1 // pred_fallthru
      _
    // Predicated region
    $region14: #{tpu_custom_call.1} parent=1 // pred_check
      _
    $region15: #{tpu_custom_call.1} parent=1 // pred_check_branch
      %250 = sbr.rel (0) target = $region17
    $region16: #{tpu_custom_call.1} parent=1 // pred_region
      %251 = dma.done [#allocation4], 256
    $region17: #{tpu_custom_call.1} parent=1 // pred_fallthru
      _
    %252 = vsyncpa [#allocation3], 1
    %253 = vsyncpa [#allocation4], 1

</llo_original>
